<compile_context>
chip_gen: v6e
topology: v6e:2x2x1
jax: 0.10.0
libtpu: 0.0.40
codegen_flags: <defaults>
</compile_context>

<pallas_src>
import functools

import jax
import jax.numpy as jnp
from jax import lax
from jax.experimental import pallas as pl
from jax.experimental.pallas import tpu as pltpu

_EPS = 1e-12  # torch.nn.functional.normalize default eps


def _round_up(x, m):
    return (x + m - 1) // m * m


# --------------------------------------------------------------------------
# Kernel A: fused RoBERTa pooler (dense + tanh) + l2-normalize, one row tile.
# ctx rows and label rows are stacked into a single operand so the (H,H)
# pooler weight makes a single pass through the MXU.
# --------------------------------------------------------------------------
def _pooler_kernel(x_ref, w_ref, b_ref, out_ref):
    pre = jnp.dot(x_ref[...], w_ref[...], preferred_element_type=jnp.float32)
    rep = jnp.tanh(pre + b_ref[...].astype(jnp.float32))            # (TR, H) f32
    ssq = jnp.sum(rep * rep, axis=-1, keepdims=True)                # (TR, 1)
    # 1/max(||x||, eps) == rsqrt(max(||x||^2, eps^2)); EUP rsqrt, no VPU divide
    inv = lax.rsqrt(jnp.maximum(ssq, jnp.float32(_EPS * _EPS)))
    out_ref[...] = (rep * inv).astype(out_ref.dtype)


# --------------------------------------------------------------------------
# Kernel B: cosine-similarity logits + per-example cross-entropy, one batch
# tile.  lbl_n is read whole; batch tiles are independent ("parallel" grid).
# --------------------------------------------------------------------------
def _head_kernel(ctx_n_ref, lbl_n_ref, labels_ref, logits_ref, nll_ref,
                 *, num_labels, num_rows, tile_rows):
    # (TB,H) x (L_pad,H) contracting H of both operands: MXU consumes the
    # transposed RHS natively -> no lbl_n.T materialisation.
    logits = lax.dot_general(
        ctx_n_ref[...], lbl_n_ref[...],
        dimension_numbers=(((1,), (1,)), ((), ())),
        preferred_element_type=jnp.float32)                         # (TB, L_pad)
    logits_ref[...] = logits

    col = lax.broadcasted_iota(jnp.int32, logits.shape, 1)
    # padded label columns must not contribute to max / LSE
    masked = jnp.where(col < num_labels, logits, jnp.float32(-1e30))

    m = jnp.max(masked, axis=-1, keepdims=True)                     # (TB, 1)
    lse = m + jnp.log(jnp.sum(jnp.exp(masked - m), axis=-1, keepdims=True))

    labels = labels_ref[...]                                        # (TB, 1) int32
    picked = jnp.sum(jnp.where(col == labels, logits, 0.0),
                     axis=-1, keepdims=True)                        # (TB, 1)

    row = (lax.broadcasted_iota(jnp.int32, (tile_rows, 1), 0)
           + pl.program_id(0) * tile_rows)
    valid = (row < num_rows).astype(jnp.float32)                    # mask padded batch rows
    nll_ref[...] = (lse - picked) * valid


# --------------------------------------------------------------------------
# Wrapper
# --------------------------------------------------------------------------
def zero_shot_classifier_forward(ctx_cls, lbl_cls, w_pool, b_pool, labels,
                                 *, matmul_dtype=jnp.bfloat16):
    """ctx_cls:(B,H)  lbl_cls:(L,H)  w_pool:(H,H)  b_pool:(1,H)  labels:(B,1) int32."""
    B, H = ctx_cls.shape
    L, _ = lbl_cls.shape

    # --- padding for lane/sublane-dense tiles --------------------------------
    L_pad = _round_up(L, 128)                      # lane-dense logits columns
    TB = min(128, _round_up(B, 8))                 # batch tile rows
    B_pad = _round_up(B, TB)

    ctx_p = jnp.pad(ctx_cls, ((0, B_pad - B), (0, 0)))
    lbl_p = jnp.pad(lbl_cls, ((0, L_pad - L), (0, 0)))

    # --- call A: fused pooler over stacked [ctx; lbl] rows --------------------
    stack = jnp.concatenate([ctx_p, lbl_p], axis=0)
    R = B_pad + L_pad
    TR = min(128, _round_up(R, 8))                 # L_pad >= 128 -> TR == 128
    R_pad = _round_up(R, TR)
    stack = jnp.pad(stack, ((0, R_pad - R), (0, 0))).astype(matmul_dtype)
    w = w_pool.astype(matmul_dtype)
    b = b_pool.astype(jnp.float32)

    reps_n = pl.pallas_call(
        _pooler_kernel,
        out_shape=jax.ShapeDtypeStruct((R_pad, H), matmul_dtype),
        grid_spec=pltpu.PrefetchScalarGridSpec(
            num_scalar_prefetch=0,
            grid=(R_pad // TR,),
            in_specs=[
                pl.BlockSpec((TR, H), lambda i: (i, 0)),
                pl.BlockSpec((H, H), lambda i: (0, 0)),
                pl.BlockSpec((1, H), lambda i: (0, 0)),
            ],
            out_specs=pl.BlockSpec((TR, H), lambda i: (i, 0)),
        ),
        compiler_params=pltpu.CompilerParams(
            dimension_semantics=("parallel",)),
    )(stack, w, b)

    ctx_n = reps_n[:B_pad]                         # (B_pad, H)
    lbl_n = reps_n[B_pad:B_pad + L_pad]            # (L_pad, H)

    labels_p = jnp.pad(labels.astype(jnp.int32), ((0, B_pad - B), (0, 0)))

    # --- call B: logits + per-example CE, batch-tiled parallel grid -----------
    n_tiles = B_pad // TB
    logits_full, nll = pl.pallas_call(
        functools.partial(_head_kernel,
                          num_labels=L, num_rows=B, tile_rows=TB),
        out_shape=(
            jax.ShapeDtypeStruct((B_pad, L_pad), jnp.float32),
            jax.ShapeDtypeStruct((B_pad, 1), jnp.float32),
        ),
        grid_spec=pltpu.PrefetchScalarGridSpec(
            num_scalar_prefetch=0,
            grid=(n_tiles,),
            in_specs=[
                pl.BlockSpec((TB, H), lambda i: (i, 0)),
                pl.BlockSpec((L_pad, H), lambda i: (0, 0)),
                pl.BlockSpec((TB, 1), lambda i: (i, 0)),
            ],
            out_specs=[
                pl.BlockSpec((TB, L_pad), lambda i: (i, 0)),
                pl.BlockSpec((TB, 1), lambda i: (i, 0)),
            ],
        ),
        compiler_params=pltpu.CompilerParams(
            dimension_semantics=("parallel",)),
    )(ctx_n, lbl_n, labels_p)

    loss = jnp.sum(nll) / B                        # CrossEntropyLoss mean reduction
    return loss, logits_full[:B, :L]


# --------------------------------------------------------------------------
# Pure-JAX reference (module semantics, f32 throughout)
# --------------------------------------------------------------------------
def _reference(ctx_cls, lbl_cls, w_pool, b_pool, labels):
    def norm(x):
        n = jnp.sqrt(jnp.sum(x * x, axis=-1, keepdims=True))
        return x / jnp.maximum(n, _EPS)

    ctx_rep = jnp.tanh(ctx_cls @ w_pool + b_pool)
    lbl_rep = jnp.tanh(lbl_cls @ w_pool + b_pool)
    logits = norm(ctx_rep) @ norm(lbl_rep).T
    lse = jax.scipy.special.logsumexp(logits, axis=-1)
    picked = jnp.take_along_axis(logits, labels, axis=-1)[:, 0]
    return jnp.mean(lse - picked), logits


if __name__ == "__main__":
    B, L, H = 8, 8, 128  # batch, num zero-shot labels, hidden size (small/synthetic)

    key = jax.random.PRNGKey(0)
    k1, k2, k3, k4, k5 = jax.random.split(key, 5)

    ctx_cls = jax.random.normal(k1, (B, H), dtype=jnp.float32)      # [CLS] hidden, inputs
    lbl_cls = jax.random.normal(k2, (L, H), dtype=jnp.float32)      # [CLS] hidden, label verbalizers
    w_pool = jax.random.normal(k3, (H, H), dtype=jnp.float32) * 0.02
    b_pool = jax.random.normal(k4, (1, H), dtype=jnp.float32) * 0.02
    labels = jax.random.randint(k5, (B, 1), 0, L, dtype=jnp.int32)  # true label indices

    ref_loss, ref_logits = _reference(ctx_cls, lbl_cls, w_pool, b_pool, labels)

    # 1) exact f32 matmul path: tight numerical check of the algorithm
    loss32, logits32 = zero_shot_classifier_forward(
        ctx_cls, lbl_cls, w_pool, b_pool, labels, matmul_dtype=jnp.float32)
    jax.block_until_ready((loss32, logits32))
    assert jnp.allclose(loss32, ref_loss, atol=1e-5, rtol=1e-5), (loss32, ref_loss)
    assert jnp.allclose(logits32, ref_logits, atol=1e-5, rtol=1e-5)

    # 2) default bf16-operand MXU fast path (v6e/v7x): looser tolerance
    loss_bf, logits_bf = zero_shot_classifier_forward(
        ctx_cls, lbl_cls, w_pool, b_pool, labels)
    jax.block_until_ready((loss_bf, logits_bf))
    assert jnp.allclose(loss_bf, ref_loss, atol=3e-2, rtol=0.0), (loss_bf, ref_loss)
    assert jnp.allclose(logits_bf, ref_logits, atol=3e-2, rtol=0.0)

    print("KERNEL_OK")
</pallas_src>

<mosaic_0001>
module attributes {stable_mosaic.version = 11 : i64} {
  func.func @_pooler_kernel(%arg0: i32, %arg1: memref<128x128xf32, #tpu.memory_space<vmem>>, %arg2: memref<128x128xf32, #tpu.memory_space<vmem>>, %arg3: memref<1x128xf32, #tpu.memory_space<vmem>>, %arg4: memref<128x128xf32, #tpu.memory_space<vmem>>) attributes {dimension_semantics = [#tpu.dimension_semantics<parallel>], iteration_bounds = array<i64: 2>, scalar_prefetch = 0 : i64, scratch_operands = 0 : i64, tpu.core_type = #tpu.core_type<tc>, window_params = [{transform_indices = @transform_0, window_bounds = array<i64: 128, 128>}, {pipeline_mode = #tpu.pipeline_mode<synchronous>, transform_indices = @transform_1, window_bounds = array<i64: 128, 128>}, {pipeline_mode = #tpu.pipeline_mode<synchronous>, transform_indices = @transform_2, window_bounds = array<i64: 1, 128>}, {transform_indices = @transform_3, window_bounds = array<i64: 128, 128>}]} {
    %c0 = arith.constant 0 : index
    %c0_0 = arith.constant 0 : index
    %0 = vector.load %arg1[%c0, %c0_0] : memref<128x128xf32, #tpu.memory_space<vmem>>, vector<128x128xf32>
    %c0_1 = arith.constant 0 : index
    %c0_2 = arith.constant 0 : index
    %1 = vector.load %arg2[%c0_1, %c0_2] : memref<128x128xf32, #tpu.memory_space<vmem>>, vector<128x128xf32>
    %cst = arith.constant dense<0.000000e+00> : vector<128x128xf32>
    %2 = tpu.matmul %0, %1, %cst {dimension_numbers = #tpu.dot_dimension_numbers<[1], [0], [0], [1], [0, 0, 1, 1], [], []>} : vector<128x128xf32>, vector<128x128xf32>, vector<128x128xf32> -> vector<128x128xf32>
    %c0_3 = arith.constant 0 : index
    %c0_4 = arith.constant 0 : index
    %3 = vector.load %arg3[%c0_3, %c0_4] : memref<1x128xf32, #tpu.memory_space<vmem>>, vector<1x128xf32>
    %4 = vector.broadcast %3 : vector<1x128xf32> to vector<128x128xf32>
    %5 = arith.addf %2, %4 : vector<128x128xf32>
    %6 = math.tanh %5 : vector<128x128xf32>
    %7 = arith.mulf %6, %6 : vector<128x128xf32>
    %cst_5 = arith.constant dense<0.000000e+00> : vector<128xf32>
    %8 = vector.multi_reduction <add>, %7, %cst_5 [1] : vector<128x128xf32> to vector<128xf32>
    %9 = vector.shape_cast %8 : vector<128xf32> to vector<128x1xf32>
    %cst_6 = arith.constant 1.000000e-24 : f32
    %10 = vector.broadcast %cst_6 : f32 to vector<128x1xf32>
    %11 = arith.maximumf %9, %10 : vector<128x1xf32>
    %12 = math.rsqrt %11 : vector<128x1xf32>
    %13 = vector.broadcast %12 : vector<128x1xf32> to vector<128x128xf32>
    %14 = arith.mulf %6, %13 : vector<128x128xf32>
    %c0_7 = arith.constant 0 : index
    %c0_8 = arith.constant 0 : index
    %15 = vector.load %arg4[%c0_7, %c0_8] : memref<128x128xf32, #tpu.memory_space<vmem>>, vector<128x128xf32>
    tpu.vector_store %arg4[%c0_7, %c0_8], %14 {strides = array<i32>} : memref<128x128xf32, #tpu.memory_space<vmem>>, vector<128x128xf32>,
    return
  }
  func.func @transform_0(%arg0: i32) -> (i32, i32) {
    %c0_i32 = arith.constant 0 : i32
    %c0_i32_0 = arith.constant 0 : i32
    return %arg0, %c0_i32 : i32, i32
  }
  func.func @transform_1(%arg0: i32) -> (i32, i32) {
    %c0_i32 = arith.constant 0 : i32
    %c0_i32_0 = arith.constant 0 : i32
    %c0_i32_1 = arith.constant 0 : i32
    return %c0_i32, %c0_i32_0 : i32, i32
  }
  func.func @transform_2(%arg0: i32) -> (i32, i32) {
    %c0_i32 = arith.constant 0 : i32
    %c0_i32_0 = arith.constant 0 : i32
    %c0_i32_1 = arith.constant 0 : i32
    return %c0_i32, %c0_i32_0 : i32, i32
  }
  func.func @transform_3(%arg0: i32) -> (i32, i32) {
    %c0_i32 = arith.constant 0 : i32
    %c0_i32_0 = arith.constant 0 : i32
    return %arg0, %c0_i32 : i32, i32
  }
}

</mosaic_0001>

<llo_original>
// kernel: tpu_custom_call.1
$region0: #{tpu_custom_call.1}
  #allocation0 [shape = 'u32[]', space=smem, size = 0x4, offset = 0x4, fixed_abs, tag = 'smem constant byte address 0x4 - core index']
  #allocation1 [shape = 'u32[144,128]{1,0:T(1,128)}', space=vmem, size = 0x12000, scoped, tag = 'internal scratch']
  %s0 = inlined_call_operand.hbm [shape: f32[256,128], index: 0, kind: input, shape index: {}]
  %s1 = inlined_call_operand.hbm [shape: f32[128,128], index: 1, kind: input, shape index: {}]
  %s2 = inlined_call_operand.vmem [shape: f32[1,128], index: 2, kind: input, shape index: {}]
  %s3 = inlined_call_operand.hbm [shape: f32[256,128], index: 3, kind: output, shape index: {}]
  %s4 = sld [smem:[#allocation0]]
  $region53: #{tpu_custom_call.1} parent=0
    _
  %s6 = ssub.s32 1, %s4
  %s7 = scalar_select 0, %s6, %s4
  $region1: #{tpu_custom_call.1} parent=0
    #allocation2 [shape = 'u8[131072]{0}', space=vmem, size = 0x20000, scoped, tag = 'input window, operand 0']
    #allocation3 [shape = 's32[2]{0}', space=sflag, size = 0x8, scoped, tag = 'scoped memory for tpu_custom_call.1']
    #allocation4 [shape = 's32[2]{0}', space=sflag, size = 0x8, scoped, tag = 'scoped memory for tpu_custom_call.1']
    #allocation5 [shape = 'u8[65536]{0}', space=vmem, size = 0x10000, scoped, tag = 'input window, operand 1, single buffered']
    #allocation6 [shape = 's32[1]{0}', space=sflag, size = 0x4, scoped, tag = 'scoped memory for tpu_custom_call.1']
    #allocation7 [shape = 'u8[131072]{0}', space=vmem, size = 0x20000, scoped, tag = 'output window, operand 0']
    %8 = vsyncpa [#allocation3], 0
    %s9 = scalar_lea.sflag [#allocation3], 1
    %10 = vsyncpa %s9, 0
    %11 = vsyncpa [#allocation6], 0
    %12 = vsyncpa [#allocation4], 0
    %s13 = scalar_lea.sflag [#allocation4], 1
    %14 = vsyncpa %s13, 0
    loop: start=0, step=1, limit=4
    $region2: #{tpu_custom_call.1} parent=1 // loop_pre_header
      _
    $region3: #{tpu_custom_call.1} parent=1 // loop_header
      %s16 = sphi 0, %s20
      %p17 = scmp.ge.s32.totalorder %s16, 4
      %s26 = sphi 0, %s28
      %s29 = sphi 0, %s26
      %s30 = sphi 0, %s29
      %s46 = sphi 0, %s30
      %s50 = sphi 0, %s50
      %s52 = sphi 0, %s50
      %s53 = sphi 0, %s52
      %s67 = sphi 0, %s53
      %s71 = sphi 0, %s71
      %s73 = sphi 0, %s71
      %s74 = sphi 0, %s73
      %s88 = sphi 0, %s74
      %s94 = sphi 0, %s96
      %s97 = sphi 0, %s94
      %s98 = sphi 0, %s97
      %s114 = sphi 0, %s98
    $region4: #{tpu_custom_call.1} parent=1 // loop_header_branch
      %19 = sbr.rel (%p17) target = $region8
    $region5: #{tpu_custom_call.1} parent=1 // loop_body
      %s21 = ssub.s32 %s16, 1
      %s22 = ssub.s32 %s16, 2
      %s23 = sadd.s32 %s16, 1
      %s24 = ssub.s32 %s16, %s23
      %p25 = scmp.eq.s32.totalorder %s24, 0
      %s27 = sadd.s32 %s26, 1
      %s28 = scalar_select %p25, %s26, %s27
      %p31 = pneg %p25
      %p32 = scmp.eq.s32.totalorder %s16, 1
      %p33 = por %p31, %p32
      %p34 = scmp.ne.s32.totalorder %s26, %s29
      %p35 = scmp.eq.s32.totalorder %s16, 0
      %p36 = por %p34, %p35
      %p37 = scmp.ne.s32.totalorder %s26, %s29
      %p38 = scmp.eq.s32.totalorder %s21, 1
      %p39 = por %p37, %p38
      %p40 = scmp.ne.s32.totalorder %s29, %s30
      %p41 = scmp.eq.s32.totalorder %s21, 0
      %p42 = por %p40, %p41
      %p43 = scmp.ne.s32.totalorder %s29, %s30
      %p44 = scmp.eq.s32.totalorder %s22, 1
      %p45 = por %p43, %p44
      %p47 = scmp.ne.s32.totalorder %s30, %s46
      %p48 = scmp.eq.s32.totalorder %s22, 0
      %p49 = por %p47, %p48
      %s51 = sadd.s32 %s50, 1
      %p54 = scmp.eq.s32.totalorder %s16, 1
      %p55 = scmp.ne.s32.totalorder %s50, %s52
      %p56 = scmp.eq.s32.totalorder %s16, 0
      %p57 = por %p55, %p56
      %p58 = scmp.ne.s32.totalorder %s50, %s52
      %p59 = scmp.eq.s32.totalorder %s21, 1
      %p60 = por %p58, %p59
      %p61 = scmp.ne.s32.totalorder %s52, %s53
      %p62 = scmp.eq.s32.totalorder %s21, 0
      %p63 = por %p61, %p62
      %p64 = scmp.ne.s32.totalorder %s52, %s53
      %p65 = scmp.eq.s32.totalorder %s22, 1
      %p66 = por %p64, %p65
      %p68 = scmp.ne.s32.totalorder %s53, %s67
      %p69 = scmp.eq.s32.totalorder %s22, 0
      %p70 = por %p68, %p69
      %s72 = sadd.s32 %s71, 1
      %p75 = scmp.eq.s32.totalorder %s16, 1
      %p76 = scmp.ne.s32.totalorder %s71, %s73
      %p77 = scmp.eq.s32.totalorder %s16, 0
      %p78 = por %p76, %p77
      %p79 = scmp.ne.s32.totalorder %s71, %s73
      %p80 = scmp.eq.s32.totalorder %s21, 1
      %p81 = por %p79, %p80
      %p82 = scmp.ne.s32.totalorder %s73, %s74
      %p83 = scmp.eq.s32.totalorder %s21, 0
      %p84 = por %p82, %p83
      %p85 = scmp.ne.s32.totalorder %s73, %s74
      %p86 = scmp.eq.s32.totalorder %s22, 1
      %p87 = por %p85, %p86
      %p89 = scmp.ne.s32.totalorder %s74, %s88
      %p90 = scmp.eq.s32.totalorder %s22, 0
      %p91 = por %p89, %p90
      %s92 = ssub.s32 %s16, %s23
      %p93 = scmp.eq.s32.totalorder %s92, 0
      %s95 = sadd.s32 %s94, 1
      %s96 = scalar_select %p93, %s94, %s95
      %p99 = pneg %p93
      %p100 = scmp.eq.s32.totalorder %s16, 1
      %p101 = por %p99, %p100
      %p102 = scmp.ne.s32.totalorder %s94, %s97
      %p103 = scmp.eq.s32.totalorder %s16, 0
      %p104 = por %p102, %p103
      %p105 = scmp.ne.s32.totalorder %s94, %s97
      %p106 = scmp.eq.s32.totalorder %s21, 1
      %p107 = por %p105, %p106
      %p108 = scmp.ne.s32.totalorder %s97, %s98
      %p109 = scmp.eq.s32.totalorder %s21, 0
      %p110 = por %p108, %p109
      %p111 = scmp.ne.s32.totalorder %s97, %s98
      %p112 = scmp.eq.s32.totalorder %s22, 1
      %p113 = por %p111, %p112
      %p115 = scmp.ne.s32.totalorder %s98, %s114
      %p116 = scmp.eq.s32.totalorder %s22, 0
      %p117 = por %p115, %p116
      %p118 = scmp.le.s32.totalorder 1, %s16
      %p119 = scmp.lt.s32.totalorder %s16, 3
      %p120 = pnand %p118, %p119
      %p121 = pneg %p120
      // Predicated region
      $region9: #{tpu_custom_call.1} parent=5 // pred_check
        _
      $region10: #{tpu_custom_call.1} parent=5 // pred_check_branch
        %123 = sbr.rel (%p120) target = $region12
      $region11: #{tpu_custom_call.1} parent=5 // pred_region
        %s124 = ssub.s32 %s16, 1
        // Predicated region
        $region13: #{tpu_custom_call.1} parent=11 // pred_check
          %p125 = pneg %p63
        $region14: #{tpu_custom_call.1} parent=11 // pred_check_branch
          %127 = sbr.rel (%p125) target = $region16
        $region15: #{tpu_custom_call.1} parent=11 // pred_region
          %s129 = ssub.s32 2048, 2048
          %130 = vsyncadd [#allocation6], %s129
          %s131 = sshll.u32 [#allocation5], 4
          %s132 = int_to_ptr.vmem [resolvable:$true] %s131
          %137 = dma.hbm_to_vmem [thread:$0]  %s1, 2048, %s132, [#allocation6], 128, 128, 8
        $region16: #{tpu_custom_call.1} parent=11 // pred_fallthru
          _
        // Predicated region
        $region17: #{tpu_custom_call.1} parent=11 // pred_check
          %p138 = pneg %p84
        $region18: #{tpu_custom_call.1} parent=11 // pred_check_branch
          %140 = sbr.rel (%p138) target = $region20
        $region19: #{tpu_custom_call.1} parent=11 // pred_region
          _
        $region20: #{tpu_custom_call.1} parent=11 // pred_fallthru
          _
      $region12: #{tpu_custom_call.1} parent=5 // pred_fallthru
        _
      %p141 = scmp.lt.s32.totalorder %s16, 2
      // Predicated region
      $region21: #{tpu_custom_call.1} parent=5 // pred_check
        %p142 = pneg %p141
      $region22: #{tpu_custom_call.1} parent=5 // pred_check_branch
        %144 = sbr.rel (%p142) target = $region24
      $region23: #{tpu_custom_call.1} parent=5 // pred_region
        // Predicated region
        $region25: #{tpu_custom_call.1} parent=23 // pred_check
          %p145 = pneg %p36
        $region26: #{tpu_custom_call.1} parent=23 // pred_check_branch
          %147 = sbr.rel (%p145) target = $region28
        $region27: #{tpu_custom_call.1} parent=23 // pred_region
          %s148 = sand.u32 %s26, 1
          %s149 = scalar_lea.sflag [#allocation3], %s148
          %s150 = sand.u32 %s26, 1
          %s151 = smul.addr %s150, 128
          %s152 = scalar_lea.vmem [#allocation2], %s151
          %s153 = smul.u32 16, %s16
          %s155 = ssub.s32 2048, 2048
          %156 = vsyncadd %s149, %s155
          %s157 = smul.addr %s153, 128
          %s158 = scalar_lea.hbm %s0, %s157
          %s159 = sshll.u32 %s152, 4
          %s160 = int_to_ptr.vmem [resolvable:$true] %s159
          %165 = dma.hbm_to_vmem [thread:$0]  %s158, 2048, %s160, %s149, 128, 128, 8
        $region28: #{tpu_custom_call.1} parent=23 // pred_fallthru
          _
      $region24: #{tpu_custom_call.1} parent=5 // pred_fallthru
        _
      %p166 = scmp.le.s32.totalorder 1, %s16
      %p167 = scmp.lt.s32.totalorder %s16, 3
      %p168 = pnand %p166, %p167
      %p169 = pneg %p168
      // Predicated region
      $region29: #{tpu_custom_call.1} parent=5 // pred_check
        _
      $region30: #{tpu_custom_call.1} parent=5 // pred_check_branch
        %171 = sbr.rel (%p168) target = $region32
      $region31: #{tpu_custom_call.1} parent=5 // pred_region
        %s172 = ssub.s32 %s16, 1
        %s173 = sand.u32 %s29, 1
        %s174 = scalar_lea.sflag [#allocation3], %s173
        %s175 = sand.u32 %s29, 1
        %s176 = smul.addr %s175, 128
        %s177 = scalar_lea.vmem [#allocation2], %s176
        // Predicated region
        $region33: #{tpu_custom_call.1} parent=31 // pred_check
          %p178 = pneg %p42
        $region34: #{tpu_custom_call.1} parent=31 // pred_check_branch
          %180 = sbr.rel (%p178) target = $region36
        $region35: #{tpu_custom_call.1} parent=31 // pred_region
          %181 = dma.done %s174, 2048
        $region36: #{tpu_custom_call.1} parent=31 // pred_fallthru
          _
        // Predicated region
        $region37: #{tpu_custom_call.1} parent=31 // pred_check
          %p182 = pneg %p63
        $region38: #{tpu_custom_call.1} parent=31 // pred_check_branch
          %184 = sbr.rel (%p182) target = $region40
        $region39: #{tpu_custom_call.1} parent=31 // pred_region
          %185 = dma.done [#allocation6], 2048
        $region40: #{tpu_custom_call.1} parent=31 // pred_fallthru
          _
        %s186 = sand.u32 %s29, 1
        %s187 = scalar_lea.sflag [#allocation3], %s186
        %s188 = sand.u32 %s29, 1
        %s189 = smul.addr %s188, 128
        %s190 = scalar_lea.vmem [#allocation2], %s189
        %p191 = pneg %p42
        %p192 = pneg %p39
        %p193 = pneg %p63
        %p194 = pneg %p60
        %p195 = pneg %p84
        %p196 = pneg %p81
        %p197 = pneg %p110
        %p198 = pneg %p107
        %s199 = sand.u32 %s97, 1
        %s200 = scalar_lea.sflag [#allocation4], %s199
        %s201 = sand.u32 %s97, 1
        %s202 = smul.addr %s201, 128
        %s203 = scalar_lea.vmem [#allocation7], %s202
        %s204 = smul.u32 16, %s21
        %s205 = smul.u32 16, %s21
        %v206 = vld [vmem:[%s177] sm:$0xff]
        %v207 = vld [vmem:[%s177 + $0x8] sm:$0xff]
        %v208 = vld [vmem:[%s177 + $0x10] sm:$0xff]
        %v209 = vld [vmem:[%s177 + $0x18] sm:$0xff]
        %v210 = vld [vmem:[%s177 + $0x20] sm:$0xff]
        %v211 = vld [vmem:[%s177 + $0x28] sm:$0xff]
        %v212 = vld [vmem:[%s177 + $0x30] sm:$0xff]
        %v213 = vld [vmem:[%s177 + $0x38] sm:$0xff]
        %v214 = vld [vmem:[%s177 + $0x40] sm:$0xff]
        %v215 = vld [vmem:[%s177 + $0x48] sm:$0xff]
        %v216 = vld [vmem:[%s177 + $0x50] sm:$0xff]
        %v217 = vld [vmem:[%s177 + $0x58] sm:$0xff]
        %v218 = vld [vmem:[%s177 + $0x60] sm:$0xff]
        %v219 = vld [vmem:[%s177 + $0x68] sm:$0xff]
        %v220 = vld [vmem:[%s177 + $0x70] sm:$0xff]
        %v221 = vld [vmem:[%s177 + $0x78] sm:$0xff]
        %v222 = vld [vmem:[#allocation5] sm:$0xff]
        %v223 = vld [vmem:[#allocation5 + $0x8] sm:$0xff]
        %v224 = vld [vmem:[#allocation5 + $0x10] sm:$0xff]
        %v225 = vld [vmem:[#allocation5 + $0x18] sm:$0xff]
        %v226 = vld [vmem:[#allocation5 + $0x20] sm:$0xff]
        %v227 = vld [vmem:[#allocation5 + $0x28] sm:$0xff]
        %v228 = vld [vmem:[#allocation5 + $0x30] sm:$0xff]
        %v229 = vld [vmem:[#allocation5 + $0x38] sm:$0xff]
        %v230 = vld [vmem:[#allocation5 + $0x40] sm:$0xff]
        %v231 = vld [vmem:[#allocation5 + $0x48] sm:$0xff]
        %v232 = vld [vmem:[#allocation5 + $0x50] sm:$0xff]
        %v233 = vld [vmem:[#allocation5 + $0x58] sm:$0xff]
        %v234 = vld [vmem:[#allocation5 + $0x60] sm:$0xff]
        %v235 = vld [vmem:[#allocation5 + $0x68] sm:$0xff]
        %v236 = vld [vmem:[#allocation5 + $0x70] sm:$0xff]
        %v237 = vld [vmem:[#allocation5 + $0x78] sm:$0xff]
        %v238 = vld [vmem:[%s2] sm:$0x1]
        %v240 = vlaneseq
        %v241 = vshrl.u32 %v240, 7
        %v242 = vsub.s32 0, %v241
        %v243 = vrot.slane %v238, %v242
        %245 = vmatprep.subr.mxu0 0.0
        %246 = vmatpush1.msra.mxu0 %v237
        %247 = vmatprep.subr.mxu0 0.0
        %248 = vmatpush1.msra.mxu0 %v236
        %249 = vmatprep.subr.mxu0 0.0
        %250 = vmatpush1.msra.mxu0 %v235
        %251 = vmatprep.subr.mxu0 0.0
        %252 = vmatpush1.msra.mxu0 %v234
        %253 = vmatprep.subr.mxu0 0.0
        %254 = vmatpush1.msra.mxu0 %v233
        %255 = vmatprep.subr.mxu0 0.0
        %256 = vmatpush1.msra.mxu0 %v232
        %257 = vmatprep.subr.mxu0 0.0
        %258 = vmatpush1.msra.mxu0 %v231
        %259 = vmatprep.subr.mxu0 0.0
        %260 = vmatpush1.msra.mxu0 %v230
        %261 = vmatprep.subr.mxu0 0.0
        %262 = vmatpush1.msra.mxu0 %v229
        %263 = vmatprep.subr.mxu0 0.0
        %264 = vmatpush1.msra.mxu0 %v228
        %265 = vmatprep.subr.mxu0 0.0
        %266 = vmatpush1.msra.mxu0 %v227
        %267 = vmatprep.subr.mxu0 0.0
        %268 = vmatpush1.msra.mxu0 %v226
        %269 = vmatprep.subr.mxu0 0.0
        %270 = vmatpush1.msra.mxu0 %v225
        %271 = vmatprep.subr.mxu0 0.0
        %272 = vmatpush1.msra.mxu0 %v224
        %273 = vmatprep.subr.mxu0 0.0
        %274 = vmatpush1.msra.mxu0 %v223
        %275 = vmatprep.subr.mxu0 0.0
        %276 = vmatpush1.msra.mxu0 %v222
        %277 = vmatprep.subr.mxu0 0.0
        %278 = vmatpush2.msra.mxu0 0.0
        %279 = vmatprep.subr.mxu0 0.0
        %280 = vmatpush2.msra.mxu0 0.0
        %281 = vmatprep.subr.mxu0 0.0
        %282 = vmatpush2.msra.mxu0 0.0
        %283 = vmatprep.subr.mxu0 0.0
        %284 = vmatpush2.msra.mxu0 0.0
        %285 = vmatprep.subr.mxu0 0.0
        %286 = vmatpush2.msra.mxu0 0.0
        %287 = vmatprep.subr.mxu0 0.0
        %288 = vmatpush2.msra.mxu0 0.0
        %289 = vmatprep.subr.mxu0 0.0
        %290 = vmatpush2.msra.mxu0 0.0
        %291 = vmatprep.subr.mxu0 0.0
        %292 = vmatpush2.msra.mxu0 0.0
        %293 = vmatprep.subr.mxu0 0.0
        %294 = vmatpush2.msra.mxu0 0.0
        %295 = vmatprep.subr.mxu0 0.0
        %296 = vmatpush2.msra.mxu0 0.0
        %297 = vmatprep.subr.mxu0 0.0
        %298 = vmatpush2.msra.mxu0 0.0
        %299 = vmatprep.subr.mxu0 0.0
        %300 = vmatpush2.msra.mxu0 0.0
        %301 = vmatprep.subr.mxu0 0.0
        %302 = vmatpush2.msra.mxu0 0.0
        %303 = vmatprep.subr.mxu0 0.0
        %304 = vmatpush2.msra.mxu0 0.0
        %305 = vmatprep.subr.mxu0 0.0
        %306 = vmatpush2.msra.mxu0 0.0
        %307 = vmatprep.subr.mxu0 0.0
        %308 = vmatpush2.msra.mxu0 0.0
        %309 = vmatprep.mubr.f32.mxu0 0.0
        %310 = vmatmul.mubr.f32.gmra.mxu0 %v206
        %v311 = vpop.f32.mrf.mxu0
        %v312 = vadd.f32 %v243, %v311
        %v313 = vpop.f32.mrf.mxu0
        %314 = vmatprep.mubr.f32.mxu0 0.0
        %315 = vmatmul.mubr.f32.gmra.mxu0 %v207
        %v316 = vpop.f32.mrf.mxu0
        %v317 = vadd.f32 %v243, %v316
        %v318 = vpop.f32.mrf.mxu0
        %319 = vmatprep.mubr.f32.mxu0 0.0
        %320 = vmatmul.mubr.f32.gmra.mxu0 %v208
        %v321 = vpop.f32.mrf.mxu0
        %v322 = vadd.f32 %v243, %v321
        %v323 = vpop.f32.mrf.mxu0
        %324 = vmatprep.mubr.f32.mxu0 0.0
        %325 = vmatmul.mubr.f32.gmra.mxu0 %v209
        %v326 = vpop.f32.mrf.mxu0
        %v327 = vadd.f32 %v243, %v326
        %v328 = vpop.f32.mrf.mxu0
        %329 = vmatprep.mubr.f32.mxu0 0.0
        %330 = vmatmul.mubr.f32.gmra.mxu0 %v210
        %v331 = vpop.f32.mrf.mxu0
        %v332 = vadd.f32 %v243, %v331
        %v333 = vpop.f32.mrf.mxu0
        %334 = vmatprep.mubr.f32.mxu0 0.0
        %335 = vmatmul.mubr.f32.gmra.mxu0 %v211
        %v336 = vpop.f32.mrf.mxu0
        %v337 = vadd.f32 %v243, %v336
        %v338 = vpop.f32.mrf.mxu0
        %339 = vmatprep.mubr.f32.mxu0 0.0
        %340 = vmatmul.mubr.f32.gmra.mxu0 %v212
        %v341 = vpop.f32.mrf.mxu0
        %v342 = vadd.f32 %v243, %v341
        %v343 = vpop.f32.mrf.mxu0
        %344 = vmatprep.mubr.f32.mxu0 0.0
        %345 = vmatmul.mubr.f32.gmra.mxu0 %v213
        %v346 = vpop.f32.mrf.mxu0
        %v347 = vadd.f32 %v243, %v346
        %v348 = vpop.f32.mrf.mxu0
        %349 = vmatprep.mubr.f32.mxu0 0.0
        %350 = vmatmul.mubr.f32.gmra.mxu0 %v214
        %v351 = vpop.f32.mrf.mxu0
        %v352 = vadd.f32 %v243, %v351
        %v353 = vpop.f32.mrf.mxu0
        %354 = vmatprep.mubr.f32.mxu0 0.0
        %355 = vmatmul.mubr.f32.gmra.mxu0 %v215
        %v356 = vpop.f32.mrf.mxu0
        %v357 = vadd.f32 %v243, %v356
        %v358 = vpop.f32.mrf.mxu0
        %359 = vmatprep.mubr.f32.mxu0 0.0
        %360 = vmatmul.mubr.f32.gmra.mxu0 %v216
        %v361 = vpop.f32.mrf.mxu0
        %v362 = vadd.f32 %v243, %v361
        %v363 = vpop.f32.mrf.mxu0
        %364 = vmatprep.mubr.f32.mxu0 0.0
        %365 = vmatmul.mubr.f32.gmra.mxu0 %v217
        %v366 = vpop.f32.mrf.mxu0
        %v367 = vadd.f32 %v243, %v366
        %v368 = vpop.f32.mrf.mxu0
        %369 = vmatprep.mubr.f32.mxu0 0.0
        %370 = vmatmul.mubr.f32.gmra.mxu0 %v218
        %v371 = vpop.f32.mrf.mxu0
        %v372 = vadd.f32 %v243, %v371
        %v373 = vpop.f32.mrf.mxu0
        %374 = vmatprep.mubr.f32.mxu0 0.0
        %375 = vmatmul.mubr.f32.gmra.mxu0 %v219
        %v376 = vpop.f32.mrf.mxu0
        %v377 = vadd.f32 %v243, %v376
        %v378 = vpop.f32.mrf.mxu0
        %379 = vmatprep.mubr.f32.mxu0 0.0
        %380 = vmatmul.mubr.f32.gmra.mxu0 %v220
        %v381 = vpop.f32.mrf.mxu0
        %v382 = vadd.f32 %v243, %v381
        %v383 = vpop.f32.mrf.mxu0
        %384 = vmatprep.mubr.f32.mxu0 0.0
        %385 = vmatmul.mubr.f32.gmra.mxu0 %v221
        %v386 = vpop.f32.mrf.mxu0
        %v387 = vadd.f32 %v243, %v386
        %v388 = vpop.f32.mrf.mxu0
        %389 = vdwg.mxu0
        %v390 = vtanh.pop %v312
        %v391 = vtanh.pop %v317
        %v392 = vtanh.pop %v322
        %v393 = vtanh.pop %v327
        %v394 = vtanh.pop %v332
        %v395 = vtanh.pop %v337
        %v396 = vtanh.pop %v342
        %v397 = vtanh.pop %v347
        %v398 = vtanh.pop %v352
        %v399 = vtanh.pop %v357
        %v400 = vtanh.pop %v362
        %v401 = vtanh.pop %v367
        %v402 = vtanh.pop %v372
        %v403 = vtanh.pop %v377
        %v404 = vtanh.pop %v382
        %v405 = vtanh.pop %v387
        %v406 = vmul.f32 %v390, %v390
        %v407 = vmul.f32 %v391, %v391
        %v408 = vmul.f32 %v392, %v392
        %v409 = vmul.f32 %v393, %v393
        %v410 = vmul.f32 %v394, %v394
        %v411 = vmul.f32 %v395, %v395
        %v412 = vmul.f32 %v396, %v396
        %v413 = vmul.f32 %v397, %v397
        %v414 = vmul.f32 %v398, %v398
        %v415 = vmul.f32 %v399, %v399
        %v416 = vmul.f32 %v400, %v400
        %v417 = vmul.f32 %v401, %v401
        %v418 = vmul.f32 %v402, %v402
        %v419 = vmul.f32 %v403, %v403
        %v420 = vmul.f32 %v404, %v404
        %v421 = vmul.f32 %v405, %v405
        %422 = vadd.xlane.f32.xlu0 %v406
        %v423 = vpop.xlane.xlu0 %422
        %424 = vadd.xlane.f32.xlu0 %v407
        %v425 = vpop.xlane.xlu0 %424
        %426 = vadd.xlane.f32.xlu0 %v408
        %v427 = vpop.xlane.xlu0 %426
        %428 = vadd.xlane.f32.xlu0 %v409
        %v429 = vpop.xlane.xlu0 %428
        %430 = vadd.xlane.f32.xlu0 %v410
        %v431 = vpop.xlane.xlu0 %430
        %432 = vadd.xlane.f32.xlu0 %v411
        %v433 = vpop.xlane.xlu0 %432
        %434 = vadd.xlane.f32.xlu0 %v412
        %v435 = vpop.xlane.xlu0 %434
        %436 = vadd.xlane.f32.xlu0 %v413
        %v437 = vpop.xlane.xlu0 %436
        %438 = vadd.xlane.f32.xlu0 %v414
        %v439 = vpop.xlane.xlu0 %438
        %440 = vadd.xlane.f32.xlu0 %v415
        %v441 = vpop.xlane.xlu0 %440
        %442 = vadd.xlane.f32.xlu0 %v416
        %v443 = vpop.xlane.xlu0 %442
        %444 = vadd.xlane.f32.xlu0 %v417
        %v445 = vpop.xlane.xlu0 %444
        %446 = vadd.xlane.f32.xlu0 %v418
        %v447 = vpop.xlane.xlu0 %446
        %448 = vadd.xlane.f32.xlu0 %v419
        %v449 = vpop.xlane.xlu0 %448
        %450 = vadd.xlane.f32.xlu0 %v420
        %v451 = vpop.xlane.xlu0 %450
        %452 = vadd.xlane.f32.xlu0 %v421
        %v453 = vpop.xlane.xlu0 %452
        %v454 = vmax.f32 %v423, 1e-24
        %v455 = vmax.f32 %v425, 1e-24
        %v456 = vmax.f32 %v427, 1e-24
        %v457 = vmax.f32 %v429, 1e-24
        %v458 = vmax.f32 %v431, 1e-24
        %v459 = vmax.f32 %v433, 1e-24
        %v460 = vmax.f32 %v435, 1e-24
        %v461 = vmax.f32 %v437, 1e-24
        %v462 = vmax.f32 %v439, 1e-24
        %v463 = vmax.f32 %v441, 1e-24
        %v464 = vmax.f32 %v443, 1e-24
        %v465 = vmax.f32 %v445, 1e-24
        %v466 = vmax.f32 %v447, 1e-24
        %v467 = vmax.f32 %v449, 1e-24
        %v468 = vmax.f32 %v451, 1e-24
        %v469 = vmax.f32 %v453, 1e-24
        %v470 = vrsqrt.pop %v454
        %v471 = vrsqrt.pop %v455
        %v472 = vrsqrt.pop %v456
        %v473 = vrsqrt.pop %v457
        %v474 = vrsqrt.pop %v458
        %v475 = vrsqrt.pop %v459
        %v476 = vrsqrt.pop %v460
        %v477 = vrsqrt.pop %v461
        %v478 = vrsqrt.pop %v462
        %v479 = vrsqrt.pop %v463
        %v480 = vrsqrt.pop %v464
        %v481 = vrsqrt.pop %v465
        %v482 = vrsqrt.pop %v466
        %v483 = vrsqrt.pop %v467
        %v484 = vrsqrt.pop %v468
        %v485 = vrsqrt.pop %v469
        %v486 = vmul.f32 %v390, %v470
        %v487 = vmul.f32 %v391, %v471
        %v488 = vmul.f32 %v392, %v472
        %v489 = vmul.f32 %v393, %v473
        %v490 = vmul.f32 %v394, %v474
        %v491 = vmul.f32 %v395, %v475
        %v492 = vmul.f32 %v396, %v476
        %v493 = vmul.f32 %v397, %v477
        %v494 = vmul.f32 %v398, %v478
        %v495 = vmul.f32 %v399, %v479
        %v496 = vmul.f32 %v400, %v480
        %v497 = vmul.f32 %v401, %v481
        %v498 = vmul.f32 %v402, %v482
        %v499 = vmul.f32 %v403, %v483
        %v500 = vmul.f32 %v404, %v484
        %v501 = vmul.f32 %v405, %v485
        %502 = vst [vmem:[%s203] sm:$0xff] %v486
        %503 = vst [vmem:[%s203 + $0x8] sm:$0xff] %v487
        %504 = vst [vmem:[%s203 + $0x10] sm:$0xff] %v488
        %505 = vst [vmem:[%s203 + $0x18] sm:$0xff] %v489
        %506 = vst [vmem:[%s203 + $0x20] sm:$0xff] %v490
        %507 = vst [vmem:[%s203 + $0x28] sm:$0xff] %v491
        %508 = vst [vmem:[%s203 + $0x30] sm:$0xff] %v492
        %509 = vst [vmem:[%s203 + $0x38] sm:$0xff] %v493
        %510 = vst [vmem:[%s203 + $0x40] sm:$0xff] %v494
        %511 = vst [vmem:[%s203 + $0x48] sm:$0xff] %v495
        %512 = vst [vmem:[%s203 + $0x50] sm:$0xff] %v496
        %513 = vst [vmem:[%s203 + $0x58] sm:$0xff] %v497
        %514 = vst [vmem:[%s203 + $0x60] sm:$0xff] %v498
        %515 = vst [vmem:[%s203 + $0x68] sm:$0xff] %v499
        %516 = vst [vmem:[%s203 + $0x70] sm:$0xff] %v500
        %517 = vst [vmem:[%s203 + $0x78] sm:$0xff] %v501
        %s518 = sand.u32 %s97, 1
        %s519 = scalar_lea.sflag [#allocation4], %s518
        %s520 = sand.u32 %s97, 1
        %s521 = smul.addr %s520, 128
        %s522 = scalar_lea.vmem [#allocation7], %s521
        // Predicated region
        $region41: #{tpu_custom_call.1} parent=31 // pred_check
          %p523 = pneg %p107
        $region42: #{tpu_custom_call.1} parent=31 // pred_check_branch
          %525 = sbr.rel (%p523) target = $region44
        $region43: #{tpu_custom_call.1} parent=31 // pred_region
          %s526 = smul.u32 16, %s21
          %s528 = ssub.s32 2048, 2048
          %529 = vsyncadd %s519, %s528
          %s530 = smul.addr %s526, 128
          %s531 = scalar_lea.hbm %s3, %s530
          %s532 = sshll.u32 %s522, 4
          %s533 = int_to_ptr.vmem [resolvable:$true] %s532
          %538 = dma.vmem_to_hbm [thread:$0]  %s533, 2048, %s531, %s519, 128, 128, 8
        $region44: #{tpu_custom_call.1} parent=31 // pred_fallthru
          _
      $region32: #{tpu_custom_call.1} parent=5 // pred_fallthru
        _
      %p539 = scmp.le.s32.totalorder 2, %s16
      // Predicated region
      $region45: #{tpu_custom_call.1} parent=5 // pred_check
        %p540 = pneg %p539
      $region46: #{tpu_custom_call.1} parent=5 // pred_check_branch
        %542 = sbr.rel (%p540) target = $region48
      $region47: #{tpu_custom_call.1} parent=5 // pred_region
        %s543 = ssub.s32 %s16, 2
        // Predicated region
        $region49: #{tpu_custom_call.1} parent=47 // pred_check
          %p544 = pneg %p113
        $region50: #{tpu_custom_call.1} parent=47 // pred_check_branch
          %546 = sbr.rel (%p544) target = $region52
        $region51: #{tpu_custom_call.1} parent=47 // pred_region
          %s547 = sand.u32 %s98, 1
          %s548 = scalar_lea.sflag [#allocation4], %s547
          %s549 = sand.u32 %s98, 1
          %s550 = smul.addr %s549, 128
          %s551 = scalar_lea.vmem [#allocation7], %s550
          %552 = dma.done %s548, 2048
        $region52: #{tpu_custom_call.1} parent=47 // pred_fallthru
          _
      $region48: #{tpu_custom_call.1} parent=5 // pred_fallthru
        _
    $region6: #{tpu_custom_call.1} parent=1 // loop_footer
      %s20 = sadd.s32 1, %s16
    $region7: #{tpu_custom_call.1} parent=1 // loop_footer_branch
      %15 = sbr.rel target = $region3
    $region8: #{tpu_custom_call.1} parent=1 // loop_exit
      _
    %553 = vsyncpa [#allocation3], 1
    %s554 = scalar_lea.sflag [#allocation3], 1
    %555 = vsyncpa %s554, 1
    %556 = vsyncpa [#allocation6], 1
    %557 = vsyncpa [#allocation4], 1
    %s558 = scalar_lea.sflag [#allocation4], 1
    %559 = vsyncpa %s558, 1

</llo_original>
